<compile_context>
chip_gen: v7x
topology: tpu7x:2x2x1
jax: 0.10.0
libtpu: 0.0.40
codegen_flags: <defaults>
</compile_context>

<pallas_src>
import jax
import jax.numpy as jnp
import numpy as np
from jax.experimental import pallas as pl
from jax.experimental.pallas import tpu as pltpu


def _time_encode_kernel(t_ref, sel_ref, w_ref, o_ref):
    # t_ref  : (tm, fold)      folded timestamps
    # sel_ref: (fold, fold*D)  static 0/1 block-diagonal selector (resident)
    # w_ref  : (1, fold*D)     weight row tiled `fold` times (resident)
    # o_ref  : (tm, fold*D)    lane-dense output tile
    #
    # MXU expansion: t_exp[:, q*D + k] = t[:, q].  The selector is 0/1 so the
    # bf16 split passes at HIGHEST precision reconstruct the f32 timestamps
    # exactly; do NOT fold w into the selector at default precision.
    t_exp = jnp.dot(
        t_ref[...],
        sel_ref[...],
        precision=jax.lax.Precision.HIGHEST,
        preferred_element_type=jnp.float32,
    )
    # Bias is identically zero in the module, so no add.
    o_ref[...] = jnp.cos(t_exp * w_ref[...]).astype(o_ref.dtype)


def time_encode(t, weight, *, row_tile=2048, out_dtype=jnp.float32):
    """t: (B, S) f32; weight: (D,) f32 -> (B, S, D) = cos(t[..., None] * w)."""
    B, S = t.shape
    D = int(weight.shape[0])
    N = B * S

    # Fold consecutive timestamps into the 128-lane dim when D divides 128.
    fold = (128 // D) if (D <= 128 and 128 % D == 0) else 1
    lane_w = fold * D

    # ---- tile sizing -------------------------------------------------------
    n_fold = pl.cdiv(N, fold)                    # folded rows actually needed
    n_fold_r8 = ((n_fold + 7) // 8) * 8          # sublane-aligned row count

    row_tile = max(8, (int(row_tile) // 8) * 8)
    if n_fold_r8 >= 16:
        # Guarantee >= 2 grid steps so v7x's 2 TensorCores both get work.
        half = ((pl.cdiv(n_fold_r8, 2) + 7) // 8) * 8
        row_tile = min(row_tile, half)
    else:
        row_tile = min(row_tile, n_fold_r8)

    n_fold_pad = pl.cdiv(n_fold, row_tile) * row_tile
    n_pad = n_fold_pad * fold

    # ---- host-side layout (pure bitcast reshapes when N is divisible) -----
    t_flat = t.reshape(N).astype(jnp.float32)
    if n_pad != N:
        t_flat = jnp.pad(t_flat, (0, n_pad - N))
    t_fold = t_flat.reshape(n_fold_pad, fold)                   # (rows/fold, fold)

    w_row = weight.reshape(1, D).astype(jnp.float32)
    w_tiled = jnp.tile(w_row, (1, fold))                        # (1, fold*D)

    # Static 0/1 block-diagonal selector: sel[q, q*D + k] = 1.
    sel_np = np.kron(np.eye(fold, dtype=np.float32),
                     np.ones((1, D), dtype=np.float32))         # (fold, fold*D)
    sel = jnp.asarray(sel_np)

    grid = (n_fold_pad // row_tile,)

    cost = pl.CostEstimate(
        flops=2 * n_fold_pad * fold * lane_w + n_fold_pad * lane_w,
        transcendentals=n_fold_pad * lane_w,
        bytes_accessed=4 * (n_fold_pad * fold + fold * lane_w + lane_w)
        + n_fold_pad * lane_w * jnp.dtype(out_dtype).itemsize,
    )

    out = pl.pallas_call(
        _time_encode_kernel,
        out_shape=jax.ShapeDtypeStruct((n_fold_pad, lane_w), out_dtype),
        grid_spec=pltpu.PrefetchScalarGridSpec(
            num_scalar_prefetch=0,
            grid=grid,
            in_specs=[
                pl.BlockSpec((row_tile, fold), lambda i: (i, 0)),  # folded t
                pl.BlockSpec((fold, lane_w), lambda i: (0, 0)),    # selector (resident)
                pl.BlockSpec((1, lane_w), lambda i: (0, 0)),       # weight (resident)
            ],
            out_specs=pl.BlockSpec((row_tile, lane_w), lambda i: (i, 0)),
        ),
        compiler_params=pltpu.CompilerParams(
            dimension_semantics=("parallel",)),
        cost_estimate=cost,
    )(t_fold, sel, w_tiled)

    # Undo the lane fold.  When no padding was added this is a free row-major
    # reshape (no slice, no extra HBM pass); otherwise drop the padded rows.
    if n_pad == N:
        return out.reshape(B, S, D)
    return out.reshape(n_pad, D)[:N].reshape(B, S, D)


def time_encode_reference(t, weight):
    # Pure-JAX reference matching the PyTorch module (bias == 0).
    return jnp.cos(t[:, :, None] * weight[None, None, :])


if __name__ == "__main__":
    # Deterministic parameters, exactly as in TimeEncode.reset_parameters.
    dimension = 32
    weight_np = (1.0 / 10 ** np.linspace(0, 9, dimension,
                                         dtype=np.float32)).astype(np.float32)
    weight = jnp.asarray(weight_np)            # (D,) == w.weight.reshape(D)

    # Small deterministic input: batch=2, seq=8 timestamps.
    key = jax.random.PRNGKey(0)
    t = jax.random.uniform(key, (2, 8), dtype=jnp.float32) * 100.0

    out = time_encode(t, weight)
    out = jax.block_until_ready(out)

    ref = time_encode_reference(t, weight)
    assert out.shape == (2, 8, dimension), out.shape
    np.testing.assert_allclose(np.asarray(out), np.asarray(ref),
                               rtol=1e-5, atol=1e-5)
    print("KERNEL_OK")
</pallas_src>

<mosaic_0001>
module attributes {stable_mosaic.version = 11 : i64} {
  func.func @_time_encode_kernel(%arg0: i32, %arg1: memref<8x4xf32, #tpu.memory_space<vmem>>, %arg2: memref<4x128xf32, #tpu.memory_space<vmem>>, %arg3: memref<1x128xf32, #tpu.memory_space<vmem>>, %arg4: memref<8x128xf32, #tpu.memory_space<vmem>>) attributes {dimension_semantics = [#tpu.dimension_semantics<parallel>], iteration_bounds = array<i64: 1>, scalar_prefetch = 0 : i64, scratch_operands = 0 : i64, tpu.core_type = #tpu.core_type<tc>, window_params = [{transform_indices = @transform_0, window_bounds = array<i64: 8, 4>}, {pipeline_mode = #tpu.pipeline_mode<synchronous>, transform_indices = @transform_1, window_bounds = array<i64: 4, 128>}, {pipeline_mode = #tpu.pipeline_mode<synchronous>, transform_indices = @transform_2, window_bounds = array<i64: 1, 128>}, {transform_indices = @transform_3, window_bounds = array<i64: 8, 128>}]} {
    %c0 = arith.constant 0 : index
    %c0_0 = arith.constant 0 : index
    %0 = vector.load %arg1[%c0, %c0_0] : memref<8x4xf32, #tpu.memory_space<vmem>>, vector<8x4xf32>
    %c0_1 = arith.constant 0 : index
    %c0_2 = arith.constant 0 : index
    %1 = vector.load %arg2[%c0_1, %c0_2] : memref<4x128xf32, #tpu.memory_space<vmem>>, vector<4x128xf32>
    %cst = arith.constant dense<0.000000e+00> : vector<8x128xf32>
    %2 = tpu.matmul %0, %1, %cst {dimension_numbers = #tpu.dot_dimension_numbers<[1], [0], [0], [1], [0, 0, 1, 1], [], []>, precision = #tpu.contract_precision<fp32>} : vector<8x4xf32>, vector<4x128xf32>, vector<8x128xf32> -> vector<8x128xf32>
    %c0_3 = arith.constant 0 : index
    %c0_4 = arith.constant 0 : index
    %3 = vector.load %arg3[%c0_3, %c0_4] : memref<1x128xf32, #tpu.memory_space<vmem>>, vector<1x128xf32>
    %4 = vector.broadcast %3 : vector<1x128xf32> to vector<8x128xf32>
    %5 = arith.mulf %2, %4 : vector<8x128xf32>
    %6 = math.cos %5 : vector<8x128xf32>
    %c0_5 = arith.constant 0 : index
    %c0_6 = arith.constant 0 : index
    %7 = vector.load %arg4[%c0_5, %c0_6] : memref<8x128xf32, #tpu.memory_space<vmem>>, vector<8x128xf32>
    tpu.vector_store %arg4[%c0_5, %c0_6], %6 {strides = array<i32>} : memref<8x128xf32, #tpu.memory_space<vmem>>, vector<8x128xf32>,
    return
  }
  func.func @transform_0(%arg0: i32) -> (i32, i32) {
    %c0_i32 = arith.constant 0 : i32
    %c0_i32_0 = arith.constant 0 : i32
    return %arg0, %c0_i32 : i32, i32
  }
  func.func @transform_1(%arg0: i32) -> (i32, i32) {
    %c0_i32 = arith.constant 0 : i32
    %c0_i32_0 = arith.constant 0 : i32
    %c0_i32_1 = arith.constant 0 : i32
    return %c0_i32, %c0_i32_0 : i32, i32
  }
  func.func @transform_2(%arg0: i32) -> (i32, i32) {
    %c0_i32 = arith.constant 0 : i32
    %c0_i32_0 = arith.constant 0 : i32
    %c0_i32_1 = arith.constant 0 : i32
    return %c0_i32, %c0_i32_0 : i32, i32
  }
  func.func @transform_3(%arg0: i32) -> (i32, i32) {
    %c0_i32 = arith.constant 0 : i32
    %c0_i32_0 = arith.constant 0 : i32
    return %arg0, %c0_i32 : i32, i32
  }
}

</mosaic_0001>

<llo_original>
// kernel: tpu_custom_call.1
$region0: #{tpu_custom_call.1}
  #allocation0 [shape = 'u32[]', space=smem, size = 0x4, offset = 0x4, fixed_abs, tag = 'smem constant byte address 0x4 - core index']
  #allocation1 [shape = 'u32[144,128]{1,0:T(1,128)}', space=vmem, size = 0x12000, scoped, tag = 'internal scratch']
  %s0 = inlined_call_operand.vmem [shape: f32[8,4], index: 0, kind: input, shape index: {}]
  %s1 = inlined_call_operand.vmem [shape: f32[4,128], index: 1, kind: input, shape index: {}]
  %s2 = inlined_call_operand.vmem [shape: f32[1,128], index: 2, kind: input, shape index: {}]
  %s3 = inlined_call_operand.hbm [shape: f32[8,128], index: 3, kind: output, shape index: {}]
  %s4 = sld [smem:[#allocation0]]
  $region22: #{tpu_custom_call.1} parent=0
    _
  %s6 = ssub.s32 1, %s4
  %s7 = scalar_select 0, %s6, %s4
  $region1: #{tpu_custom_call.1} parent=0
    #allocation2 [shape = 'u8[4096]{0}', space=vmem, size = 0x1000, scoped, tag = 'output window, operand 0, single buffered']
    #allocation3 [shape = 's32[1]{0}', space=sflag, size = 0x4, scoped, tag = 'scoped memory for tpu_custom_call.1']
    %8 = vsyncpa [#allocation3], 0
    // Predicated region
    $region2: #{tpu_custom_call.1} parent=1 // pred_check
      _
    $region3: #{tpu_custom_call.1} parent=1 // pred_check_branch
      %10 = sbr.rel (0) target = $region5
    $region4: #{tpu_custom_call.1} parent=1 // pred_region
      _
    $region5: #{tpu_custom_call.1} parent=1 // pred_fallthru
      _
    // Predicated region
    $region6: #{tpu_custom_call.1} parent=1 // pred_check
      _
    $region7: #{tpu_custom_call.1} parent=1 // pred_check_branch
      %12 = sbr.rel (0) target = $region9
    $region8: #{tpu_custom_call.1} parent=1 // pred_region
      _
    $region9: #{tpu_custom_call.1} parent=1 // pred_fallthru
      _
    // Predicated region
    $region10: #{tpu_custom_call.1} parent=1 // pred_check
      _
    $region11: #{tpu_custom_call.1} parent=1 // pred_check_branch
      %14 = sbr.rel (0) target = $region13
    $region12: #{tpu_custom_call.1} parent=1 // pred_region
      _
    $region13: #{tpu_custom_call.1} parent=1 // pred_fallthru
      _
    %v15 = vld [vmem:[%s0] sm:$0xff]
    %v16 = vld [vmem:[%s1] sm:$0xf]
    %vm17 = vcmask 31744
    %v19 = vsel %vm17, %v15, 0
    %vm21 = vcmask 1043456
    %v23 = vsel %vm21, %v16, 0
    %25 = vmatprep.subr.mxu0 0.0
    %v26 = vand.u32 %v23, 4294901760
    %27 = vmatpush1.msra.mxu0 %v26
    %28 = vmatprep.subr.mxu0 0.0
    %29 = vmatpush1.msra.mxu0 0.0
    %30 = vmatprep.subr.mxu0 0.0
    %31 = vmatpush1.msra.mxu0 0.0
    %32 = vmatprep.subr.mxu0 0.0
    %33 = vmatpush1.msra.mxu0 0.0
    %34 = vmatprep.subr.mxu0 0.0
    %35 = vmatpush1.msra.mxu0 0.0
    %36 = vmatprep.subr.mxu0 0.0
    %37 = vmatpush1.msra.mxu0 0.0
    %38 = vmatprep.subr.mxu0 0.0
    %39 = vmatpush1.msra.mxu0 0.0
    %40 = vmatprep.subr.mxu0 0.0
    %41 = vmatpush1.msra.mxu0 0.0
    %42 = vmatprep.subr.mxu0 0.0
    %43 = vmatpush1.msra.mxu0 0.0
    %44 = vmatprep.subr.mxu0 0.0
    %45 = vmatpush1.msra.mxu0 0.0
    %46 = vmatprep.subr.mxu0 0.0
    %47 = vmatpush1.msra.mxu0 0.0
    %48 = vmatprep.subr.mxu0 0.0
    %49 = vmatpush1.msra.mxu0 0.0
    %50 = vmatprep.subr.mxu0 0.0
    %51 = vmatpush1.msra.mxu0 0.0
    %52 = vmatprep.subr.mxu0 0.0
    %53 = vmatpush1.msra.mxu0 0.0
    %54 = vmatprep.subr.mxu0 0.0
    %55 = vmatpush1.msra.mxu0 0.0
    %56 = vmatprep.subr.mxu0 0.0
    %57 = vmatpush1.msra.mxu0 0.0
    %58 = vmatprep.subr.mxu0 0.0
    %59 = vmatpush1.msra.mxu0 0.0
    %60 = vmatprep.subr.mxu0 0.0
    %61 = vmatpush1.msra.mxu0 0.0
    %62 = vmatprep.subr.mxu0 0.0
    %63 = vmatpush1.msra.mxu0 0.0
    %64 = vmatprep.subr.mxu0 0.0
    %65 = vmatpush1.msra.mxu0 0.0
    %66 = vmatprep.subr.mxu0 0.0
    %67 = vmatpush1.msra.mxu0 0.0
    %68 = vmatprep.subr.mxu0 0.0
    %69 = vmatpush1.msra.mxu0 0.0
    %70 = vmatprep.subr.mxu0 0.0
    %71 = vmatpush1.msra.mxu0 0.0
    %72 = vmatprep.subr.mxu0 0.0
    %73 = vmatpush1.msra.mxu0 0.0
    %74 = vmatprep.subr.mxu0 0.0
    %75 = vmatpush1.msra.mxu0 0.0
    %76 = vmatprep.subr.mxu0 0.0
    %77 = vmatpush1.msra.mxu0 0.0
    %78 = vmatprep.subr.mxu0 0.0
    %79 = vmatpush1.msra.mxu0 0.0
    %80 = vmatprep.subr.mxu0 0.0
    %81 = vmatpush1.msra.mxu0 0.0
    %82 = vmatprep.subr.mxu0 0.0
    %83 = vmatpush1.msra.mxu0 0.0
    %84 = vmatprep.subr.mxu0 0.0
    %85 = vmatpush1.msra.mxu0 0.0
    %86 = vmatprep.subr.mxu0 0.0
    %87 = vmatpush1.msra.mxu0 0.0
    %88 = vmatprep.subr.mxu0 0.0
    %89 = vmatpush1.msra.mxu0 0.0
    %90 = vmatprep.mubr.f32.mxu0 0.0
    %v91 = vand.u32 %v19, 4294901760
    %v92 = vsub.f32 %v19, %v91
    %v93 = vand.u32 %v92, 4294901760
    %v94 = vsub.f32 %v92, %v93
    %v95 = vand.u32 %v94, 4294901760
    %96 = vmatmul.mubr.f32.gmra.mrb[0].mxu0 %v95
    %v97 = vpop.f32.mrb[0].mxu0
    %v98 = vadd.f32 0.0, %v97
    %v99 = vpop.f32.mrb[0].mxu0
    %100 = vdwg.mxu0
    %101 = vmatprep.subr.mxu0 0.0
    %v102 = vand.u32 %v23, 4294901760
    %v103 = vsub.f32 %v23, %v102
    %v104 = vand.u32 %v103, 4294901760
    %v105 = vsub.f32 %v103, %v104
    %v106 = vand.u32 %v105, 4294901760
    %107 = vmatpush1.msra.mxu0 %v106
    %108 = vmatprep.subr.mxu0 0.0
    %109 = vmatpush1.msra.mxu0 0.0
    %110 = vmatprep.subr.mxu0 0.0
    %111 = vmatpush1.msra.mxu0 0.0
    %112 = vmatprep.subr.mxu0 0.0
    %113 = vmatpush1.msra.mxu0 0.0
    %114 = vmatprep.subr.mxu0 0.0
    %115 = vmatpush1.msra.mxu0 0.0
    %116 = vmatprep.subr.mxu0 0.0
    %117 = vmatpush1.msra.mxu0 0.0
    %118 = vmatprep.subr.mxu0 0.0
    %119 = vmatpush1.msra.mxu0 0.0
    %120 = vmatprep.subr.mxu0 0.0
    %121 = vmatpush1.msra.mxu0 0.0
    %122 = vmatprep.subr.mxu0 0.0
    %123 = vmatpush1.msra.mxu0 0.0
    %124 = vmatprep.subr.mxu0 0.0
    %125 = vmatpush1.msra.mxu0 0.0
    %126 = vmatprep.subr.mxu0 0.0
    %127 = vmatpush1.msra.mxu0 0.0
    %128 = vmatprep.subr.mxu0 0.0
    %129 = vmatpush1.msra.mxu0 0.0
    %130 = vmatprep.subr.mxu0 0.0
    %131 = vmatpush1.msra.mxu0 0.0
    %132 = vmatprep.subr.mxu0 0.0
    %133 = vmatpush1.msra.mxu0 0.0
    %134 = vmatprep.subr.mxu0 0.0
    %135 = vmatpush1.msra.mxu0 0.0
    %136 = vmatprep.subr.mxu0 0.0
    %137 = vmatpush1.msra.mxu0 0.0
    %138 = vmatprep.subr.mxu0 0.0
    %139 = vmatpush1.msra.mxu0 0.0
    %140 = vmatprep.subr.mxu0 0.0
    %141 = vmatpush1.msra.mxu0 0.0
    %142 = vmatprep.subr.mxu0 0.0
    %143 = vmatpush1.msra.mxu0 0.0
    %144 = vmatprep.subr.mxu0 0.0
    %145 = vmatpush1.msra.mxu0 0.0
    %146 = vmatprep.subr.mxu0 0.0
    %147 = vmatpush1.msra.mxu0 0.0
    %148 = vmatprep.subr.mxu0 0.0
    %149 = vmatpush1.msra.mxu0 0.0
    %150 = vmatprep.subr.mxu0 0.0
    %151 = vmatpush1.msra.mxu0 0.0
    %152 = vmatprep.subr.mxu0 0.0
    %153 = vmatpush1.msra.mxu0 0.0
    %154 = vmatprep.subr.mxu0 0.0
    %155 = vmatpush1.msra.mxu0 0.0
    %156 = vmatprep.subr.mxu0 0.0
    %157 = vmatpush1.msra.mxu0 0.0
    %158 = vmatprep.subr.mxu0 0.0
    %159 = vmatpush1.msra.mxu0 0.0
    %160 = vmatprep.subr.mxu0 0.0
    %161 = vmatpush1.msra.mxu0 0.0
    %162 = vmatprep.subr.mxu0 0.0
    %163 = vmatpush1.msra.mxu0 0.0
    %164 = vmatprep.subr.mxu0 0.0
    %165 = vmatpush1.msra.mxu0 0.0
    %166 = vmatprep.subr.mxu0 0.0
    %167 = vmatpush1.msra.mxu0 0.0
    %168 = vmatprep.subr.mxu0 0.0
    %169 = vmatpush1.msra.mxu0 0.0
    %170 = vmatprep.mubr.f32.mxu0 0.0
    %v171 = vand.u32 %v19, 4294901760
    %172 = vmatmul.mubr.f32.gmra.mrb[0].mxu0 %v171
    %v173 = vpop.f32.mrb[0].mxu0
    %v174 = vadd.f32 %v98, %v173
    %v175 = vpop.f32.mrb[0].mxu0
    %176 = vdwg.mxu0
    %177 = vmatprep.subr.mxu0 0.0
    %v178 = vand.u32 %v23, 4294901760
    %v179 = vsub.f32 %v23, %v178
    %180 = vmatpush1.msra.mxu0 %v179
    %181 = vmatprep.subr.mxu0 0.0
    %182 = vmatpush1.msra.mxu0 0.0
    %183 = vmatprep.subr.mxu0 0.0
    %184 = vmatpush1.msra.mxu0 0.0
    %185 = vmatprep.subr.mxu0 0.0
    %186 = vmatpush1.msra.mxu0 0.0
    %187 = vmatprep.subr.mxu0 0.0
    %188 = vmatpush1.msra.mxu0 0.0
    %189 = vmatprep.subr.mxu0 0.0
    %190 = vmatpush1.msra.mxu0 0.0
    %191 = vmatprep.subr.mxu0 0.0
    %192 = vmatpush1.msra.mxu0 0.0
    %193 = vmatprep.subr.mxu0 0.0
    %194 = vmatpush1.msra.mxu0 0.0
    %195 = vmatprep.subr.mxu0 0.0
    %196 = vmatpush1.msra.mxu0 0.0
    %197 = vmatprep.subr.mxu0 0.0
    %198 = vmatpush1.msra.mxu0 0.0
    %199 = vmatprep.subr.mxu0 0.0
    %200 = vmatpush1.msra.mxu0 0.0
    %201 = vmatprep.subr.mxu0 0.0
    %202 = vmatpush1.msra.mxu0 0.0
    %203 = vmatprep.subr.mxu0 0.0
    %204 = vmatpush1.msra.mxu0 0.0
    %205 = vmatprep.subr.mxu0 0.0
    %206 = vmatpush1.msra.mxu0 0.0
    %207 = vmatprep.subr.mxu0 0.0
    %208 = vmatpush1.msra.mxu0 0.0
    %209 = vmatprep.subr.mxu0 0.0
    %210 = vmatpush1.msra.mxu0 0.0
    %211 = vmatprep.subr.mxu0 0.0
    %212 = vmatpush1.msra.mxu0 0.0
    %213 = vmatprep.subr.mxu0 0.0
    %214 = vmatpush1.msra.mxu0 0.0
    %215 = vmatprep.subr.mxu0 0.0
    %216 = vmatpush1.msra.mxu0 0.0
    %217 = vmatprep.subr.mxu0 0.0
    %218 = vmatpush1.msra.mxu0 0.0
    %219 = vmatprep.subr.mxu0 0.0
    %220 = vmatpush1.msra.mxu0 0.0
    %221 = vmatprep.subr.mxu0 0.0
    %222 = vmatpush1.msra.mxu0 0.0
    %223 = vmatprep.subr.mxu0 0.0
    %224 = vmatpush1.msra.mxu0 0.0
    %225 = vmatprep.subr.mxu0 0.0
    %226 = vmatpush1.msra.mxu0 0.0
    %227 = vmatprep.subr.mxu0 0.0
    %228 = vmatpush1.msra.mxu0 0.0
    %229 = vmatprep.subr.mxu0 0.0
    %230 = vmatpush1.msra.mxu0 0.0
    %231 = vmatprep.subr.mxu0 0.0
    %232 = vmatpush1.msra.mxu0 0.0
    %233 = vmatprep.subr.mxu0 0.0
    %234 = vmatpush1.msra.mxu0 0.0
    %235 = vmatprep.subr.mxu0 0.0
    %236 = vmatpush1.msra.mxu0 0.0
    %237 = vmatprep.subr.mxu0 0.0
    %238 = vmatpush1.msra.mxu0 0.0
    %239 = vmatprep.subr.mxu0 0.0
    %240 = vmatpush1.msra.mxu0 0.0
    %241 = vmatprep.subr.mxu0 0.0
    %242 = vmatpush1.msra.mxu0 0.0
    %243 = vmatprep.mubr.f32.mxu0 0.0
    %v244 = vand.u32 %v19, 4294901760
    %v245 = vsub.f32 %v19, %v244
    %246 = vmatmul.mubr.f32.gmra.mrb[0].mxu0 %v245
    %v247 = vpop.f32.mrb[0].mxu0
    %v248 = vadd.f32 %v174, %v247
    %v249 = vpop.f32.mrb[0].mxu0
    %250 = vdwg.mxu0
    %251 = vmatprep.subr.mxu0 0.0
    %v252 = vand.u32 %v23, 4294901760
    %253 = vmatpush1.msra.mxu0 %v252
    %254 = vmatprep.subr.mxu0 0.0
    %255 = vmatpush1.msra.mxu0 0.0
    %256 = vmatprep.subr.mxu0 0.0
    %257 = vmatpush1.msra.mxu0 0.0
    %258 = vmatprep.subr.mxu0 0.0
    %259 = vmatpush1.msra.mxu0 0.0
    %260 = vmatprep.subr.mxu0 0.0
    %261 = vmatpush1.msra.mxu0 0.0
    %262 = vmatprep.subr.mxu0 0.0
    %263 = vmatpush1.msra.mxu0 0.0
    %264 = vmatprep.subr.mxu0 0.0
    %265 = vmatpush1.msra.mxu0 0.0
    %266 = vmatprep.subr.mxu0 0.0
    %267 = vmatpush1.msra.mxu0 0.0
    %268 = vmatprep.subr.mxu0 0.0
    %269 = vmatpush1.msra.mxu0 0.0
    %270 = vmatprep.subr.mxu0 0.0
    %271 = vmatpush1.msra.mxu0 0.0
    %272 = vmatprep.subr.mxu0 0.0
    %273 = vmatpush1.msra.mxu0 0.0
    %274 = vmatprep.subr.mxu0 0.0
    %275 = vmatpush1.msra.mxu0 0.0
    %276 = vmatprep.subr.mxu0 0.0
    %277 = vmatpush1.msra.mxu0 0.0
    %278 = vmatprep.subr.mxu0 0.0
    %279 = vmatpush1.msra.mxu0 0.0
    %280 = vmatprep.subr.mxu0 0.0
    %281 = vmatpush1.msra.mxu0 0.0
    %282 = vmatprep.subr.mxu0 0.0
    %283 = vmatpush1.msra.mxu0 0.0
    %284 = vmatprep.subr.mxu0 0.0
    %285 = vmatpush1.msra.mxu0 0.0
    %286 = vmatprep.subr.mxu0 0.0
    %287 = vmatpush1.msra.mxu0 0.0
    %288 = vmatprep.subr.mxu0 0.0
    %289 = vmatpush1.msra.mxu0 0.0
    %290 = vmatprep.subr.mxu0 0.0
    %291 = vmatpush1.msra.mxu0 0.0
    %292 = vmatprep.subr.mxu0 0.0
    %293 = vmatpush1.msra.mxu0 0.0
    %294 = vmatprep.subr.mxu0 0.0
    %295 = vmatpush1.msra.mxu0 0.0
    %296 = vmatprep.subr.mxu0 0.0
    %297 = vmatpush1.msra.mxu0 0.0
    %298 = vmatprep.subr.mxu0 0.0
    %299 = vmatpush1.msra.mxu0 0.0
    %300 = vmatprep.subr.mxu0 0.0
    %301 = vmatpush1.msra.mxu0 0.0
    %302 = vmatprep.subr.mxu0 0.0
    %303 = vmatpush1.msra.mxu0 0.0
    %304 = vmatprep.subr.mxu0 0.0
    %305 = vmatpush1.msra.mxu0 0.0
    %306 = vmatprep.subr.mxu0 0.0
    %307 = vmatpush1.msra.mxu0 0.0
    %308 = vmatprep.subr.mxu0 0.0
    %309 = vmatpush1.msra.mxu0 0.0
    %310 = vmatprep.subr.mxu0 0.0
    %311 = vmatpush1.msra.mxu0 0.0
    %312 = vmatprep.subr.mxu0 0.0
    %313 = vmatpush1.msra.mxu0 0.0
    %314 = vmatprep.subr.mxu0 0.0
    %315 = vmatpush1.msra.mxu0 0.0
    %316 = vmatprep.mubr.f32.mxu0 0.0
    %v317 = vand.u32 %v19, 4294901760
    %v318 = vsub.f32 %v19, %v317
    %v319 = vand.u32 %v318, 4294901760
    %320 = vmatmul.mubr.f32.gmra.mrb[0].mxu0 %v319
    %v321 = vpop.f32.mrb[0].mxu0
    %v322 = vadd.f32 %v248, %v321
    %v323 = vpop.f32.mrb[0].mxu0
    %324 = vdwg.mxu0
    %325 = vmatprep.subr.mxu0 0.0
    %v326 = vand.u32 %v23, 4294901760
    %v327 = vsub.f32 %v23, %v326
    %v328 = vand.u32 %v327, 4294901760
    %329 = vmatpush1.msra.mxu0 %v328
    %330 = vmatprep.subr.mxu0 0.0
    %331 = vmatpush1.msra.mxu0 0.0
    %332 = vmatprep.subr.mxu0 0.0
    %333 = vmatpush1.msra.mxu0 0.0
    %334 = vmatprep.subr.mxu0 0.0
    %335 = vmatpush1.msra.mxu0 0.0
    %336 = vmatprep.subr.mxu0 0.0
    %337 = vmatpush1.msra.mxu0 0.0
    %338 = vmatprep.subr.mxu0 0.0
    %339 = vmatpush1.msra.mxu0 0.0
    %340 = vmatprep.subr.mxu0 0.0
    %341 = vmatpush1.msra.mxu0 0.0
    %342 = vmatprep.subr.mxu0 0.0
    %343 = vmatpush1.msra.mxu0 0.0
    %344 = vmatprep.subr.mxu0 0.0
    %345 = vmatpush1.msra.mxu0 0.0
    %346 = vmatprep.subr.mxu0 0.0
    %347 = vmatpush1.msra.mxu0 0.0
    %348 = vmatprep.subr.mxu0 0.0
    %349 = vmatpush1.msra.mxu0 0.0
    %350 = vmatprep.subr.mxu0 0.0
    %351 = vmatpush1.msra.mxu0 0.0
    %352 = vmatprep.subr.mxu0 0.0
    %353 = vmatpush1.msra.mxu0 0.0
    %354 = vmatprep.subr.mxu0 0.0
    %355 = vmatpush1.msra.mxu0 0.0
    %356 = vmatprep.subr.mxu0 0.0
    %357 = vmatpush1.msra.mxu0 0.0
    %358 = vmatprep.subr.mxu0 0.0
    %359 = vmatpush1.msra.mxu0 0.0
    %360 = vmatprep.subr.mxu0 0.0
    %361 = vmatpush1.msra.mxu0 0.0
    %362 = vmatprep.subr.mxu0 0.0
    %363 = vmatpush1.msra.mxu0 0.0
    %364 = vmatprep.subr.mxu0 0.0
    %365 = vmatpush1.msra.mxu0 0.0
    %366 = vmatprep.subr.mxu0 0.0
    %367 = vmatpush1.msra.mxu0 0.0
    %368 = vmatprep.subr.mxu0 0.0
    %369 = vmatpush1.msra.mxu0 0.0
    %370 = vmatprep.subr.mxu0 0.0
    %371 = vmatpush1.msra.mxu0 0.0
    %372 = vmatprep.subr.mxu0 0.0
    %373 = vmatpush1.msra.mxu0 0.0
    %374 = vmatprep.subr.mxu0 0.0
    %375 = vmatpush1.msra.mxu0 0.0
    %376 = vmatprep.subr.mxu0 0.0
    %377 = vmatpush1.msra.mxu0 0.0
    %378 = vmatprep.subr.mxu0 0.0
    %379 = vmatpush1.msra.mxu0 0.0
    %380 = vmatprep.subr.mxu0 0.0
    %381 = vmatpush1.msra.mxu0 0.0
    %382 = vmatprep.subr.mxu0 0.0
    %383 = vmatpush1.msra.mxu0 0.0
    %384 = vmatprep.subr.mxu0 0.0
    %385 = vmatpush1.msra.mxu0 0.0
    %386 = vmatprep.subr.mxu0 0.0
    %387 = vmatpush1.msra.mxu0 0.0
    %388 = vmatprep.subr.mxu0 0.0
    %389 = vmatpush1.msra.mxu0 0.0
    %390 = vmatprep.subr.mxu0 0.0
    %391 = vmatpush1.msra.mxu0 0.0
    %392 = vmatprep.mubr.f32.mxu0 0.0
    %v393 = vand.u32 %v19, 4294901760
    %394 = vmatmul.mubr.f32.gmra.mrb[0].mxu0 %v393
    %v395 = vpop.f32.mrb[0].mxu0
    %v396 = vadd.f32 %v322, %v395
    %v397 = vpop.f32.mrb[0].mxu0
    %398 = vdwg.mxu0
    %399 = vmatprep.subr.mxu0 0.0
    %v400 = vand.u32 %v23, 4294901760
    %401 = vmatpush1.msra.mxu0 %v400
    %402 = vmatprep.subr.mxu0 0.0
    %403 = vmatpush1.msra.mxu0 0.0
    %404 = vmatprep.subr.mxu0 0.0
    %405 = vmatpush1.msra.mxu0 0.0
    %406 = vmatprep.subr.mxu0 0.0
    %407 = vmatpush1.msra.mxu0 0.0
    %408 = vmatprep.subr.mxu0 0.0
    %409 = vmatpush1.msra.mxu0 0.0
    %410 = vmatprep.subr.mxu0 0.0
    %411 = vmatpush1.msra.mxu0 0.0
    %412 = vmatprep.subr.mxu0 0.0
    %413 = vmatpush1.msra.mxu0 0.0
    %414 = vmatprep.subr.mxu0 0.0
    %415 = vmatpush1.msra.mxu0 0.0
    %416 = vmatprep.subr.mxu0 0.0
    %417 = vmatpush1.msra.mxu0 0.0
    %418 = vmatprep.subr.mxu0 0.0
    %419 = vmatpush1.msra.mxu0 0.0
    %420 = vmatprep.subr.mxu0 0.0
    %421 = vmatpush1.msra.mxu0 0.0
    %422 = vmatprep.subr.mxu0 0.0
    %423 = vmatpush1.msra.mxu0 0.0
    %424 = vmatprep.subr.mxu0 0.0
    %425 = vmatpush1.msra.mxu0 0.0
    %426 = vmatprep.subr.mxu0 0.0
    %427 = vmatpush1.msra.mxu0 0.0
    %428 = vmatprep.subr.mxu0 0.0
    %429 = vmatpush1.msra.mxu0 0.0
    %430 = vmatprep.subr.mxu0 0.0
    %431 = vmatpush1.msra.mxu0 0.0
    %432 = vmatprep.subr.mxu0 0.0
    %433 = vmatpush1.msra.mxu0 0.0
    %434 = vmatprep.subr.mxu0 0.0
    %435 = vmatpush1.msra.mxu0 0.0
    %436 = vmatprep.subr.mxu0 0.0
    %437 = vmatpush1.msra.mxu0 0.0
    %438 = vmatprep.subr.mxu0 0.0
    %439 = vmatpush1.msra.mxu0 0.0
    %440 = vmatprep.subr.mxu0 0.0
    %441 = vmatpush1.msra.mxu0 0.0
    %442 = vmatprep.subr.mxu0 0.0
    %443 = vmatpush1.msra.mxu0 0.0
    %444 = vmatprep.subr.mxu0 0.0
    %445 = vmatpush1.msra.mxu0 0.0
    %446 = vmatprep.subr.mxu0 0.0
    %447 = vmatpush1.msra.mxu0 0.0
    %448 = vmatprep.subr.mxu0 0.0
    %449 = vmatpush1.msra.mxu0 0.0
    %450 = vmatprep.subr.mxu0 0.0
    %451 = vmatpush1.msra.mxu0 0.0
    %452 = vmatprep.subr.mxu0 0.0
    %453 = vmatpush1.msra.mxu0 0.0
    %454 = vmatprep.subr.mxu0 0.0
    %455 = vmatpush1.msra.mxu0 0.0
    %456 = vmatprep.subr.mxu0 0.0
    %457 = vmatpush1.msra.mxu0 0.0
    %458 = vmatprep.subr.mxu0 0.0
    %459 = vmatpush1.msra.mxu0 0.0
    %460 = vmatprep.subr.mxu0 0.0
    %461 = vmatpush1.msra.mxu0 0.0
    %462 = vmatprep.subr.mxu0 0.0
    %463 = vmatpush1.msra.mxu0 0.0
    %464 = vmatprep.mubr.f32.mxu0 0.0
    %v465 = vand.u32 %v19, 4294901760
    %466 = vmatmul.mubr.f32.gmra.mrb[0].mxu0 %v465
    %v467 = vpop.f32.mrb[0].mxu0
    %v468 = vadd.f32 %v396, %v467
    %v469 = vpop.f32.mrb[0].mxu0
    %470 = vdwg.mxu0
    %v471 = vld [vmem:[%s2] sm:$0x1]
    %v473 = vlaneseq
    %v474 = vshrl.u32 %v473, 7
    %v475 = vsub.s32 0, %v474
    %v476 = vrot.slane %v471, %v475
    %v478 = vmul.f32 %v468, %v476
    %v479 = vand.u32 2147483647, %v478
    %vm480 = vcmp.le.f32.partialorder %v479, 0.7853982
    %vm481 = vcmp.lt.s32.totalorder %v478, 0
    %v482 = vand.u32 %v478, 2139095040
    %v483 = vshrl.u32 %v482, 23
    %v484 = vsub.s32 %v483, 127
    %v485 = vand.u32 2147483647, %v478
    %v486 = vand.u32 %v485, 8388607
    %v487 = vor.u32 %v486, 8388608
    %v488 = vsub.s32 0, %v487
    %v489 = vadd.s32 %v484, 1
    %vm490 = vcmp.gt.s32.totalorder %v489, 0
    %v491 = vsel %vm490, %v489, 0
    %v492 = vshrl.u32 %v491, 5
    %v493 = vand.u32 %v491, 31
    %v494 = vsub.s32 32, %v493
    %v495 = vshrl.u32 683565275, %v494
    %v496 = vshll.u32 683565275, %v493
    %v497 = vshrl.u32 2475754826, %v494
    %v498 = vor.u32 %v496, %v497
    %v499 = vshll.u32 2475754826, %v493
    %v500 = vshrl.u32 2131351028, %v494
    %v501 = vor.u32 %v499, %v500
    %v502 = vshll.u32 2131351028, %v493
    %v503 = vshrl.u32 2102212464, %v494
    %v504 = vor.u32 %v502, %v503
    %v505 = vshll.u32 2102212464, %v493
    %v506 = vshrl.u32 920167782, %v494
    %v507 = vor.u32 %v505, %v506
    %v508 = vshll.u32 920167782, %v493
    %v509 = vshrl.u32 1326507024, %v494
    %v510 = vor.u32 %v508, %v509
    %vm511 = vcmp.lt.s32.totalorder %v492, 1
    %vm512 = vcmp.lt.s32.totalorder %v492, 2
    %vm513 = vcmp.lt.s32.totalorder %v492, 3
    %vm514 = vcmp.lt.s32.totalorder %v492, 4
    %v515 = vsel %vm511, %v495, %v498
    %v516 = vsel %vm514, %v504, 2102212464
    %v517 = vsel %vm513, %v501, %v516
    %v518 = vsel %vm512, %v515, %v517
    %v519 = vsel %vm511, %v498, %v501
    %v520 = vsel %vm514, %v507, 920167782
    %v521 = vsel %vm513, %v504, %v520
    %v522 = vsel %vm512, %v519, %v521
    %v523 = vsel %vm511, %v501, %v504
    %v524 = vsel %vm514, %v510, 1326507024
    %v525 = vsel %vm513, %v507, %v524
    %v526 = vsel %vm512, %v523, %v525
    %v527 = vshll.u32 %v487, 8
    %v528 = vmul.u32.u64.compose %v527, %v526
    %v529 = vextract.low.u32 %v528
    %v530 = vextract.high.u32 %v528
    %v531 = vmul.u32.u64.compose %v527, %v522
    %v532 = vextract.low.u32 %v531
    %v533 = vextract.high.u32 %v531
    %v534 = vmul.u32 %v527, %v518
    %v535 = vadd.s32 %v530, %v532
    %vm536 = vc.u32 %v530, %v532
    %v537 = vadd.s32 %v533, 1
    %v538 = vsel %vm536, %v537, %v533
    %v539 = vadd.s32 %v534, %v538
    %v540 = vadd.s32 %v539, 536870912
    %v541 = vshrl.u32 %v540, 30
    %v542 = vshll.u32 %v541, 30
    %v543 = vsub.s32 %v539, %v542
    %vm544 = vcmp.lt.s32.totalorder %v543, 0
    %v545 = vsub.s32 0, %v543
    %v546 = vsel %vm544, %v545, %v543
    %v547 = vclz %v546
    %v548 = vsub.s32 %v547, 2
    %vm549 = vcmp.gt.s32.totalorder 0, %v548
    %v550 = vsel %vm549, 0, %v548
    %v551 = vsub.s32 32, %v550
    %v552 = vshll.u32 %v543, %v550
    %v553 = vshrl.u32 %v535, %v551
    %v554 = vor.u32 %v552, %v553
    %v555 = vsub.s32 4294967266, %v550
    %v556 = vadd.s32 %v555, 127
    %v557 = vshll.u32 %v556, 23
    %v558 = vor.u32 4788187, %v557
    %v559 = vand.u32 2147483647, %v558
    %v561 = vcvt.s32.f32 %v554
    %v562 = vmul.f32 %v561, %v559
    %v563 = vxor.u32 %v562, 2147483648
    %v564 = vsel %vm481, %v563, %v562
    %v565 = vsub.s32 4, %v541
    %v566 = vsel %vm481, %v565, %v541
    %v567 = vsel %vm480, %v478, %v564
    %v568 = vsel %vm480, 0, %v566
    %v569 = vcosq.f32.pop %v567
    %v570 = vsinq.f32.pop %v567
    %vm571 = vweird.f32 %v478
    %v572 = vand.u32 %v568, 3
    %vm573 = vcmp.lt.s32.totalorder %v572, 2
    %vm574 = vcmp.eq.s32.totalorder %v572, 0
    %v575 = vxor.u32 %v570, 2147483648
    %v576 = vsel %vm574, %v569, %v575
    %vm577 = vcmp.eq.s32.totalorder %v572, 2
    %v578 = vxor.u32 %v569, 2147483648
    %v579 = vsel %vm577, %v578, %v570
    %v580 = vsel %vm573, %v576, %v579
    %v581 = vsel %vm571, nan, %v580
    %582 = vst [vmem:[#allocation2] sm:$0xff] %v581
    // Predicated region
    $region14: #{tpu_custom_call.1} parent=1 // pred_check
      _
    $region15: #{tpu_custom_call.1} parent=1 // pred_check_branch
      %584 = sbr.rel (0) target = $region17
    $region16: #{tpu_custom_call.1} parent=1 // pred_region
      %s586 = ssub.s32 128, 128
      %587 = vsyncadd [#allocation3], %s586
      %s589 = sshll.u32 [#allocation2], 4
      %s590 = int_to_ptr.vmem [resolvable:$true] %s589
      %592 = dma.vmem_to_hbm [thread:$0]  %s590, 128, %s3, [#allocation3]
    $region17: #{tpu_custom_call.1} parent=1 // pred_fallthru
      _
    // Predicated region
    $region18: #{tpu_custom_call.1} parent=1 // pred_check
      _
    $region19: #{tpu_custom_call.1} parent=1 // pred_check_branch
      %594 = sbr.rel (0) target = $region21
    $region20: #{tpu_custom_call.1} parent=1 // pred_region
      %595 = dma.done [#allocation3], 128
    $region21: #{tpu_custom_call.1} parent=1 // pred_fallthru
      _
    %596 = vsyncpa [#allocation3], 1

</llo_original>
